<compile_context>
chip_gen: v7x
topology: tpu7x:2x2x1
jax: 0.10.0
libtpu: 0.0.40
codegen_flags: <defaults>
</compile_context>

<pallas_src>
import functools

import jax
import jax.numpy as jnp
from jax.experimental import pallas as pl
from jax.experimental.pallas import tpu as pltpu

LANES = 128
SUBLANES = 8


def _chip_config():
    """Return (num_tensorcores, max_tile_rows) for the attached TPU generation."""
    try:
        kind = jax.devices()[0].device_kind.lower()
    except Exception:  # defensive: never fail config detection
        kind = ""
    if "v7" in kind:
        # v7x: 2 TensorCores/chip, fastest HBM -> bigger tiles to amortize the
        # fixed per-grid-step overhead.  4 MiB per input buffer.
        return 2, 8192
    # v5e / v6e: single TensorCore.  2 MiB per input buffer.
    return 1, 4096


def _rse_kernel(shift_ref, p_ref, t_ref, acc_ref, *,
                tile_r, tiles_per_core, rows_valid, need_mask):
    """Accumulate (8,128)-shaped partial sums into the per-core output block.

    acc_ref block shape (1, 3, 8, 128) f32:
        [0, 0] : partials of sum((t - p)^2)
        [0, 1] : partials of sum(t - shift)
        [0, 2] : partials of sum((t - shift)^2)
    """
    c = pl.program_id(0)              # core axis (parallel across TCs on v7x)
    i = pl.program_id(1)              # streaming / reduction axis (arbitrary)

    @pl.when(i == 0)
    def _init():
        acc_ref[...] = jnp.zeros_like(acc_ref)

    shift = shift_ref[0]              # f32 scalar from SMEM

    def fold(x):
        # (tile_r, 128) -> (8, 128): reduce groups of 8 rows with VPU adds
        # only (no per-tile cross-lane XLU work).
        g, rem = divmod(tile_r, SUBLANES)
        if rem == 0:
            return jnp.sum(x.reshape(g, SUBLANES, LANES), axis=0)
        # Tiny-input corner (tile_r < 8 or not a multiple of 8): park the
        # remainder rows' sum in sublane 0.
        out = jnp.zeros((SUBLANES, LANES), jnp.float32)
        if g:
            out = out + jnp.sum(
                x[: g * SUBLANES].reshape(g, SUBLANES, LANES), axis=0)
        tail = jnp.sum(x[g * SUBLANES:], axis=0, keepdims=True)     # (1, 128)
        row = jax.lax.broadcasted_iota(jnp.int32, (SUBLANES, LANES), 0)
        return out + jnp.where(
            row == 0, jnp.broadcast_to(tail, (SUBLANES, LANES)), 0.0)

    def accumulate(t, p):
        d = t - p                      # shift cancels: d == t_raw - p_raw
        acc_ref[0, 0, :, :] += fold(d * d)
        acc_ref[0, 1, :, :] += fold(t)
        acc_ref[0, 2, :, :] += fold(t * t)

    # Shift both operands by y_true[0]; numerator unchanged, variance below is
    # computed on ~zero-offset data.
    t = t_ref[...].astype(jnp.float32) - shift
    p = p_ref[...].astype(jnp.float32) - shift

    if not need_mask:
        # Every tile is fully valid: no masking cost at all.
        accumulate(t, p)
    else:
        row0 = (c * tiles_per_core + i) * tile_r      # global first row of tile
        is_full = row0 + tile_r <= rows_valid

        @pl.when(is_full)
        def _full_tile():              # steady state: unmasked
            accumulate(t, p)

        @pl.when(jnp.logical_not(is_full))
        def _ragged_tile():            # last (or duplicated) tile only
            rid = row0 + jax.lax.broadcasted_iota(jnp.int32, (tile_r, LANES), 0)
            m = rid < rows_valid
            accumulate(jnp.where(m, t, 0.0), jnp.where(m, p, 0.0))


def rse_loss(y_pred, y_true):
    """Pallas TPU implementation of RSELoss.forward (returns a scalar)."""
    assert y_pred.shape == y_true.shape, "y_pred / y_true must match shapes"
    n_elems = int(y_true.size)
    assert n_elems > 0

    num_cores, max_tile_r = _chip_config()

    p = y_pred.reshape(-1)
    t = y_true.reshape(-1)
    shift = t[:1].astype(jnp.float32)                 # (1,) -> SMEM scalar

    # Lane padding only when numel is not a multiple of 128 (the only copying
    # path).  Padded zeros' contribution to the shifted sums is removed
    # analytically in the epilogue below.
    # TODO(synk): a manual-DMA (pl.ANY) path could avoid even this rare copy.
    lane_pad = (-n_elems) % LANES
    padded_len = n_elems + lane_pad
    if lane_pad:
        p = jnp.pad(p, (0, lane_pad))
        t = jnp.pad(t, (0, lane_pad))
    rows = padded_len // LANES

    p2d = p.reshape(rows, LANES)                      # free bitcast reshape
    t2d = t.reshape(rows, LANES)

    # One full-array tile when it fits, else fixed 4096/8192-row tiles with
    # the ragged last tile masked in-kernel (no row padding, no extra copy).
    tile_r = rows if rows <= max_tile_r else max_tile_r
    tiles_total = -(-rows // tile_r)
    num_cores = min(num_cores, tiles_total)
    tiles_per_core = -(-tiles_total // num_cores)
    need_mask = num_cores * tiles_per_core * tile_r != rows

    if num_cores == 1:
        data_map = lambda c, i: (i, 0)
    else:
        last_tile = tiles_total - 1
        # Clamp so an over-allocated per-core tile maps in-bounds; its
        # contribution is fully masked off in the kernel.
        data_map = lambda c, i: (jnp.minimum(c * tiles_per_core + i, last_tile), 0)

    kernel = functools.partial(
        _rse_kernel, tile_r=tile_r, tiles_per_core=tiles_per_core,
        rows_valid=rows, need_mask=need_mask)

    core_sem = getattr(pltpu, "CORE_PARALLEL", "parallel") if num_cores > 1 else "arbitrary"

    itemsize = jnp.dtype(y_true.dtype).itemsize
    cost = pl.CostEstimate(
        flops=9 * padded_len,
        bytes_accessed=2 * padded_len * itemsize
        + num_cores * 3 * SUBLANES * LANES * 4,
        transcendentals=0)

    partials = pl.pallas_call(
        kernel,
        out_shape=jax.ShapeDtypeStruct(
            (num_cores, 3, SUBLANES, LANES), jnp.float32),
        grid_spec=pltpu.PrefetchScalarGridSpec(
            num_scalar_prefetch=0,
            grid=(num_cores, tiles_per_core),
            in_specs=[
                pl.BlockSpec(memory_space=pltpu.MemorySpace.SMEM),   # shift
                pl.BlockSpec((tile_r, LANES), data_map),             # y_pred
                pl.BlockSpec((tile_r, LANES), data_map),             # y_true
            ],
            # Per-core output block doubles as the VMEM-resident accumulator;
            # written back to HBM once per core (reduction axis is innermost).
            out_specs=pl.BlockSpec(
                (1, 3, SUBLANES, LANES), lambda c, i: (c, 0, 0, 0)),
        ),
        compiler_params=pltpu.CompilerParams(
            dimension_semantics=(core_sem, "arbitrary"),
            vmem_limit_bytes=32 * 1024 * 1024,
        ),
        cost_estimate=cost,
    )(shift, p2d, t2d)

    # Tiny epilogue: combine the (num_cores, 3, 8, 128) partials and divide.
    sums = jnp.sum(partials, axis=(0, 2, 3), dtype=jnp.float32)      # (3,)
    numerator = sums[0]
    sum_ts, sum_ts2 = sums[1], sums[2]
    shift_s = shift[0]
    if lane_pad:
        # Padded zeros contributed (-shift) and shift^2 per element; undo.
        sum_ts = sum_ts + shift_s * lane_pad
        sum_ts2 = sum_ts2 - shift_s * shift_s * lane_pad
    denominator = sum_ts2 - (sum_ts * sum_ts) / jnp.float32(n_elems) + 1e-8
    return numerator / denominator


def rse_loss_ref(y_pred, y_true):
    """Plain-JAX reference matching the PyTorch module semantics."""
    num = jnp.sum((y_true - y_pred) ** 2)
    den = jnp.sum((y_true - jnp.mean(y_true)) ** 2) + 1e-8
    return num / den


if __name__ == "__main__":
    key = jax.random.PRNGKey(0)
    k1, k2 = jax.random.split(key)

    # Small shapes consistent with a regression head output: (2, 4, 16, 16)
    y_pred = jax.random.normal(k1, (2, 4, 16, 16), dtype=jnp.float32)
    y_true = jax.random.normal(k2, (2, 4, 16, 16), dtype=jnp.float32)

    rse = jax.block_until_ready(jax.jit(rse_loss)(y_pred, y_true))
    ref = jax.block_until_ready(rse_loss_ref(y_pred, y_true))

    assert jnp.allclose(rse, ref, rtol=1e-4, atol=1e-6), (rse, ref)
    print("KERNEL_OK")
</pallas_src>

<mosaic_0001>
module attributes {stable_mosaic.version = 11 : i64} {
  func.func @_rse_kernel(%arg0: i32, %arg1: i32, %arg2: memref<1xf32, #tpu.memory_space<smem>>, %arg3: memref<16x128xf32, #tpu.memory_space<vmem>>, %arg4: memref<16x128xf32, #tpu.memory_space<vmem>>, %arg5: memref<1x3x8x128xf32, #tpu.memory_space<vmem>>) attributes {dimension_semantics = [#tpu.dimension_semantics<arbitrary>, #tpu.dimension_semantics<arbitrary>], iteration_bounds = array<i64: 1, 1>, scalar_prefetch = 0 : i64, scratch_operands = 0 : i64, tpu.core_type = #tpu.core_type<tc>, window_params = [{transform_indices = @transform_0, window_bounds = array<i64: 1>}, {transform_indices = @transform_1, window_bounds = array<i64: 16, 128>}, {transform_indices = @transform_2, window_bounds = array<i64: 16, 128>}, {transform_indices = @transform_3, window_bounds = array<i64: 1, 3, 8, 128>}]} {
    %c0_i32 = arith.constant 0 : i32
    %0 = arith.cmpi eq, %arg1, %c0_i32 : i32
    %1 = arith.extui %0 : i1 to i32
    %c0_i32_0 = arith.constant 0 : i32
    %2 = arith.cmpi ne, %1, %c0_i32_0 : i32
    scf.if %2 {
      %cst_29 = arith.constant 0.000000e+00 : f32
      %37 = vector.broadcast %cst_29 : f32 to vector<1x3x8x128xf32>
      %c0_30 = arith.constant 0 : index
      %c0_31 = arith.constant 0 : index
      %c0_32 = arith.constant 0 : index
      %c0_33 = arith.constant 0 : index
      %38 = vector.load %arg5[%c0_30, %c0_31, %c0_32, %c0_33] : memref<1x3x8x128xf32, #tpu.memory_space<vmem>>, vector<1x3x8x128xf32>
      tpu.vector_store %arg5[%c0_30, %c0_31, %c0_32, %c0_33], %37 {strides = array<i32>} : memref<1x3x8x128xf32, #tpu.memory_space<vmem>>, vector<1x3x8x128xf32>,
    } else {
    }
    %c0 = arith.constant 0 : index
    %3 = memref.load %arg2[%c0] : memref<1xf32, #tpu.memory_space<smem>>
    %c0_1 = arith.constant 0 : index
    %c0_2 = arith.constant 0 : index
    %4 = vector.load %arg4[%c0_1, %c0_2] : memref<16x128xf32, #tpu.memory_space<vmem>>, vector<16x128xf32>
    %5 = vector.broadcast %3 : f32 to vector<16x128xf32>
    %6 = arith.subf %4, %5 : vector<16x128xf32>
    %c0_3 = arith.constant 0 : index
    %c0_4 = arith.constant 0 : index
    %7 = vector.load %arg3[%c0_3, %c0_4] : memref<16x128xf32, #tpu.memory_space<vmem>>, vector<16x128xf32>
    %8 = vector.broadcast %3 : f32 to vector<16x128xf32>
    %9 = arith.subf %7, %8 : vector<16x128xf32>
    %10 = arith.subf %6, %9 : vector<16x128xf32>
    %c0_5 = arith.constant 0 : index
    %c0_6 = arith.constant 0 : index
    %c0_7 = arith.constant 0 : index
    %c0_8 = arith.constant 0 : index
    %11 = vector.load %arg5[%c0_5, %c0_6, %c0_7, %c0_8] : memref<1x3x8x128xf32, #tpu.memory_space<vmem>>, vector<1x1x8x128xf32>
    %12 = vector.shape_cast %11 : vector<1x1x8x128xf32> to vector<8x128xf32>
    %13 = arith.mulf %10, %10 : vector<16x128xf32>
    %14 = vector.shape_cast %13 : vector<16x128xf32> to vector<2x8x128xf32>
    %cst = arith.constant dense<0.000000e+00> : vector<8x128xf32>
    %15 = vector.multi_reduction <add>, %14, %cst [0] : vector<2x8x128xf32> to vector<8x128xf32>
    %16 = arith.addf %12, %15 : vector<8x128xf32>
    %c0_9 = arith.constant 0 : index
    %c0_10 = arith.constant 0 : index
    %c0_11 = arith.constant 0 : index
    %c0_12 = arith.constant 0 : index
    %17 = vector.load %arg5[%c0_9, %c0_10, %c0_11, %c0_12] : memref<1x3x8x128xf32, #tpu.memory_space<vmem>>, vector<1x1x8x128xf32>
    %18 = vector.shape_cast %17 : vector<1x1x8x128xf32> to vector<8x128xf32>
    %19 = vector.shape_cast %16 : vector<8x128xf32> to vector<1x1x8x128xf32>
    tpu.vector_store %arg5[%c0_9, %c0_10, %c0_11, %c0_12], %19 {strides = array<i32>} : memref<1x3x8x128xf32, #tpu.memory_space<vmem>>, vector<1x1x8x128xf32>,
    %c0_13 = arith.constant 0 : index
    %c1 = arith.constant 1 : index
    %c0_14 = arith.constant 0 : index
    %c0_15 = arith.constant 0 : index
    %20 = vector.load %arg5[%c0_13, %c1, %c0_14, %c0_15] : memref<1x3x8x128xf32, #tpu.memory_space<vmem>>, vector<1x1x8x128xf32>
    %21 = vector.shape_cast %20 : vector<1x1x8x128xf32> to vector<8x128xf32>
    %22 = vector.shape_cast %6 : vector<16x128xf32> to vector<2x8x128xf32>
    %cst_16 = arith.constant dense<0.000000e+00> : vector<8x128xf32>
    %23 = vector.multi_reduction <add>, %22, %cst_16 [0] : vector<2x8x128xf32> to vector<8x128xf32>
    %24 = arith.addf %21, %23 : vector<8x128xf32>
    %c0_17 = arith.constant 0 : index
    %c1_18 = arith.constant 1 : index
    %c0_19 = arith.constant 0 : index
    %c0_20 = arith.constant 0 : index
    %25 = vector.load %arg5[%c0_17, %c1_18, %c0_19, %c0_20] : memref<1x3x8x128xf32, #tpu.memory_space<vmem>>, vector<1x1x8x128xf32>
    %26 = vector.shape_cast %25 : vector<1x1x8x128xf32> to vector<8x128xf32>
    %27 = vector.shape_cast %24 : vector<8x128xf32> to vector<1x1x8x128xf32>
    tpu.vector_store %arg5[%c0_17, %c1_18, %c0_19, %c0_20], %27 {strides = array<i32>} : memref<1x3x8x128xf32, #tpu.memory_space<vmem>>, vector<1x1x8x128xf32>,
    %c0_21 = arith.constant 0 : index
    %c2 = arith.constant 2 : index
    %c0_22 = arith.constant 0 : index
    %c0_23 = arith.constant 0 : index
    %28 = vector.load %arg5[%c0_21, %c2, %c0_22, %c0_23] : memref<1x3x8x128xf32, #tpu.memory_space<vmem>>, vector<1x1x8x128xf32>
    %29 = vector.shape_cast %28 : vector<1x1x8x128xf32> to vector<8x128xf32>
    %30 = arith.mulf %6, %6 : vector<16x128xf32>
    %31 = vector.shape_cast %30 : vector<16x128xf32> to vector<2x8x128xf32>
    %cst_24 = arith.constant dense<0.000000e+00> : vector<8x128xf32>
    %32 = vector.multi_reduction <add>, %31, %cst_24 [0] : vector<2x8x128xf32> to vector<8x128xf32>
    %33 = arith.addf %29, %32 : vector<8x128xf32>
    %c0_25 = arith.constant 0 : index
    %c2_26 = arith.constant 2 : index
    %c0_27 = arith.constant 0 : index
    %c0_28 = arith.constant 0 : index
    %34 = vector.load %arg5[%c0_25, %c2_26, %c0_27, %c0_28] : memref<1x3x8x128xf32, #tpu.memory_space<vmem>>, vector<1x1x8x128xf32>
    %35 = vector.shape_cast %34 : vector<1x1x8x128xf32> to vector<8x128xf32>
    %36 = vector.shape_cast %33 : vector<8x128xf32> to vector<1x1x8x128xf32>
    tpu.vector_store %arg5[%c0_25, %c2_26, %c0_27, %c0_28], %36 {strides = array<i32>} : memref<1x3x8x128xf32, #tpu.memory_space<vmem>>, vector<1x1x8x128xf32>,
    return
  }
  func.func @transform_0(%arg0: i32, %arg1: i32) -> i32 {
    %c0_i32 = arith.constant 0 : i32
    %c0_i32_0 = arith.constant 0 : i32
    return %c0_i32 : i32
  }
  func.func @transform_1(%arg0: i32, %arg1: i32) -> (i32, i32) {
    %c0_i32 = arith.constant 0 : i32
    %c0_i32_0 = arith.constant 0 : i32
    return %arg1, %c0_i32 : i32, i32
  }
  func.func @transform_2(%arg0: i32, %arg1: i32) -> (i32, i32) {
    %c0_i32 = arith.constant 0 : i32
    %c0_i32_0 = arith.constant 0 : i32
    return %arg1, %c0_i32 : i32, i32
  }
  func.func @transform_3(%arg0: i32, %arg1: i32) -> (i32, i32, i32, i32) {
    %c0_i32 = arith.constant 0 : i32
    %c0_i32_0 = arith.constant 0 : i32
    %c0_i32_1 = arith.constant 0 : i32
    %c0_i32_2 = arith.constant 0 : i32
    return %arg0, %c0_i32, %c0_i32_0, %c0_i32_1 : i32, i32, i32, i32
  }
}

</mosaic_0001>

<llo_original>
// kernel: rse_loss.1
$region0: #{rse_loss.1}
  #allocation0 [shape = 'u32[]', space=smem, size = 0x4, offset = 0x4, fixed_abs, tag = 'smem constant byte address 0x4 - core index']
  #allocation1 [shape = 'u32[144,128]{1,0:T(1,128)}', space=vmem, size = 0x12000, scoped, tag = 'internal scratch']
  #allocation2 [shape = 'f32[1]{0:T(128)S(6)}', space=smem, size = 0x200, scoped, tag = 'scoped memory for rse_loss.1']
  %s0 = inlined_call_operand.<no memory space> [shape: f32[1], index: 0, kind: input, shape index: {}]
  %s1 = inlined_call_operand.vmem [shape: f32[16,128], index: 1, kind: input, shape index: {}]
  %s2 = inlined_call_operand.vmem [shape: f32[16,128], index: 2, kind: input, shape index: {}]
  %s3 = inlined_call_operand.vmem [shape: f32[1,3,8,128], index: 3, kind: output, shape index: {}]
  %s4 = sld [smem:[#allocation0]]
  $region26: #{rse_loss.1} parent=0
    _
  %s6 = ssub.s32 1, %s4
  %s7 = scalar_select 0, %s6, %s4
  %8 = sst [smem:[#allocation2]] %s0
  // Predicated region
  $region2: #{rse_loss.1} parent=0 // pred_check
    _
  $region3: #{rse_loss.1} parent=0 // pred_check_branch
    %10 = sbr.rel (0) target = $region5
  $region4: #{rse_loss.1} parent=0 // pred_region
    _
  $region5: #{rse_loss.1} parent=0 // pred_fallthru
    _
  // Predicated region
  $region6: #{rse_loss.1} parent=0 // pred_check
    _
  $region7: #{rse_loss.1} parent=0 // pred_check_branch
    %12 = sbr.rel (0) target = $region9
  $region8: #{rse_loss.1} parent=0 // pred_region
    _
  $region9: #{rse_loss.1} parent=0 // pred_fallthru
    _
  // Predicated region
  $region10: #{rse_loss.1} parent=0 // pred_check
    _
  $region11: #{rse_loss.1} parent=0 // pred_check_branch
    %14 = sbr.rel (0) target = $region13
  $region12: #{rse_loss.1} parent=0 // pred_region
    _
  $region13: #{rse_loss.1} parent=0 // pred_fallthru
    _
  %p15 = scmp.eq.s32.totalorder 0, 0
  // Predicated region
  $region14: #{rse_loss.1} parent=0 // pred_check
    %p16 = pneg %p15
  $region15: #{rse_loss.1} parent=0 // pred_check_branch
    %18 = sbr.rel (%p16) target = $region17
  $region16: #{rse_loss.1} parent=0 // pred_region
    %19 = vst [vmem:[%s3] sm:$0xff] 0.0
    %20 = vst [vmem:[%s3 + $0x8] sm:$0xff] 0.0
    %21 = vst [vmem:[%s3 + $0x10] sm:$0xff] 0.0
  $region17: #{rse_loss.1} parent=0 // pred_fallthru
    _
  %s22 = sld [smem:[#allocation2]]
  %v23 = vld [vmem:[%s2] sm:$0xff]
  %v24 = vld [vmem:[%s2 + $0x8] sm:$0xff]
  %v25 = vstv %s22
  %v26 = vsub.f32 %v23, %v25
  %v27 = vsub.f32 %v24, %v25
  %v28 = vld [vmem:[%s1] sm:$0xff]
  %v29 = vld [vmem:[%s1 + $0x8] sm:$0xff]
  %v30 = vsub.f32 %v28, %v25
  %v31 = vsub.f32 %v29, %v25
  %v32 = vsub.f32 %v26, %v30
  %v33 = vsub.f32 %v27, %v31
  %v34 = vld [vmem:[%s3] sm:$0xff]
  %v35 = vmul.f32 %v32, %v32
  %v36 = vmul.f32 %v33, %v33
  %v37 = vadd.f32 %v35, %v36
  %v38 = vadd.f32 %v34, %v37
  %39 = vst [vmem:[%s3] sm:$0xff] %v38
  %s40 = scalar_lea.vmem %s3, 8
  %v41 = vld [vmem:[%s40] sm:$0xff]
  %v42 = vadd.f32 %v26, %v27
  %v43 = vadd.f32 %v41, %v42
  %44 = vst [vmem:[%s40] sm:$0xff] %v43
  %s45 = scalar_lea.vmem %s3, 16
  %v46 = vld [vmem:[%s45] sm:$0xff]
  %v47 = vmul.f32 %v26, %v26
  %v48 = vmul.f32 %v27, %v27
  %v49 = vadd.f32 %v47, %v48
  %v50 = vadd.f32 %v46, %v49
  %51 = vst [vmem:[%s45] sm:$0xff] %v50
  // Predicated region
  $region18: #{rse_loss.1} parent=0 // pred_check
    _
  $region19: #{rse_loss.1} parent=0 // pred_check_branch
    %53 = sbr.rel (0) target = $region21
  $region20: #{rse_loss.1} parent=0 // pred_region
    _
  $region21: #{rse_loss.1} parent=0 // pred_fallthru
    _
  // Predicated region
  $region22: #{rse_loss.1} parent=0 // pred_check
    _
  $region23: #{rse_loss.1} parent=0 // pred_check_branch
    %55 = sbr.rel (0) target = $region25
  $region24: #{rse_loss.1} parent=0 // pred_region
    _
  $region25: #{rse_loss.1} parent=0 // pred_fallthru
    _

</llo_original>
